<compile_context>
chip_gen: v5e
topology: v5e:2x2
jax: 0.10.0
libtpu: 0.0.40
codegen_flags: <defaults>
</compile_context>

<pallas_src>
import jax
import jax.numpy as jnp
from jax.experimental import pallas as pl
from jax.experimental.pallas import tpu as pltpu


def _layer_scale_kernel(x_ref, lam_ref, o_ref):
    # x_ref: (TR, TH) activation tile; lam_ref: whole (1, H) scale row in VMEM.
    th = x_ref.shape[-1]
    if lam_ref.shape[-1] == th:
        lam = lam_ref[...]                      # common case: hidden not split
    else:
        # Hidden axis split across grid axis 1; th is a multiple of 128 here.
        start = pl.multiple_of(pl.program_id(1) * th, 128)
        lam = lam_ref[:, pl.ds(start, th)]
    # Promote to f32 for the product, cast result to the activation dtype.
    o_ref[...] = (x_ref[...].astype(jnp.float32)
                  * lam.astype(jnp.float32)).astype(o_ref.dtype)


def _round_up(a: int, b: int) -> int:
    return -(-a // b) * b


def _chip_defaults():
    """Return (target_block_bytes, tensorcores_per_chip) for the local chip."""
    kind = ""
    try:
        kind = jax.devices()[0].device_kind.lower()
    except Exception:
        pass
    if "v7" in kind or "7x" in kind:
        return 8 << 20, 2        # v7x: big blocks + megacore split
    if "v6" in kind or "trillium" in kind:
        return 4 << 20, 1        # v6e: 4 MiB stays under 32 MiB scoped default
    if "v5" in kind:
        return 2 << 20, 1        # v5e: 2 MiB is already ~93% efficient
    return 2 << 20, 1            # unknown chip: conservative


def dinov2_layer_scale(hidden_state: jax.Array, lambda1: jax.Array,
                       *, target_block_bytes: int | None = None) -> jax.Array:
    """hidden_state: (..., hidden), lambda1: (hidden,)."""
    orig_shape = hidden_state.shape
    hidden = orig_shape[-1]
    assert lambda1.shape == (hidden,)

    dtype = hidden_state.dtype
    itemsize = jnp.dtype(dtype).itemsize
    tb, num_tc = _chip_defaults()
    if target_block_bytes is not None:
        tb = target_block_bytes

    # Keep lambda at its native precision (f32 in the module); the kernel
    # multiplies in f32 and casts the result, matching PyTorch's promotion.
    lam = lambda1

    x2d = hidden_state.reshape(-1, hidden)            # (rows, hidden)
    rows, h = x2d.shape

    # Lane-dense repack for narrow hidden (<128 lanes): fold rows into lanes.
    if h < 128 and 128 % h == 0:
        f = 128 // h
        if rows % f == 0:
            x2d = x2d.reshape(rows // f, f * h)
            lam = jnp.tile(lam, f)
            rows, h = x2d.shape
    lam2d = lam.reshape(1, h)

    # Sublane quantum per dtype: 8 (f32), 16 (bf16), 32 (int8/fp8).
    sublane = max(8, 32 // itemsize)

    # Hidden-axis tile: full hidden unless extremely wide.  max_lanes accounts
    # for the sublane quantum so split-hidden blocks still honor the budget.
    max_lanes = max(128, (tb // (sublane * itemsize)) // 128 * 128)
    th = h if (h <= max_lanes or h % 128 != 0) else max_lanes

    # Row tile: ~tb bytes per block, a multiple of the sublane quantum.
    tr = max(sublane, (tb // (th * itemsize)) // sublane * sublane)
    tr = min(tr, _round_up(rows, sublane))

    # Megacore (2-TC chips only): aim for >=4 row steps (>=2 per TensorCore)
    # so each core still double-buffers.  Never force a split on 1-TC chips.
    if num_tc > 1 and rows > 2 * sublane:
        steps = 4 if rows >= 4 * sublane else 2
        tr = min(tr, _round_up(pl.cdiv(rows, steps), sublane))

    grid = (pl.cdiv(rows, tr), pl.cdiv(h, th))

    # Scoped-VMEM budget: double-buffered in + out blocks, resident lambda,
    # plus margin; always below v7x's 64 MiB physical VMEM per TensorCore.
    block_bytes = tr * th * itemsize
    lam_bytes = 8 * _round_up(h, 128) * 4
    vmem_limit = 4 * block_bytes + lam_bytes + (6 << 20)
    vmem_limit = int(min(max(vmem_limit, 24 << 20), 56 << 20))

    out2d = pl.pallas_call(
        _layer_scale_kernel,
        out_shape=jax.ShapeDtypeStruct((rows, h), dtype),
        grid_spec=pltpu.PrefetchScalarGridSpec(
            num_scalar_prefetch=0,
            grid=grid,
            in_specs=[
                pl.BlockSpec((tr, th), lambda i, j: (i, j)),
                # Whole lambda resident in VMEM for the entire kernel: no
                # per-step re-DMA and no double-buffer for the scale row.
                pl.BlockSpec(memory_space=pltpu.MemorySpace.VMEM),
            ],
            out_specs=pl.BlockSpec((tr, th), lambda i, j: (i, j)),
        ),
        # In-place scale: halves peak HBM footprint when callers donate the
        # activation buffer (XLA copies when they don't, so always correct).
        input_output_aliases={0: 0},
        compiler_params=pltpu.CompilerParams(
            dimension_semantics=("parallel", "parallel"),
            vmem_limit_bytes=vmem_limit),
    )(x2d, lam2d)

    return out2d.reshape(orig_shape)


if __name__ == "__main__":
    batch, seq, hidden = 2, 8, 32

    key = jax.random.PRNGKey(0)
    kx, kl = jax.random.split(key)
    hidden_state = jax.random.normal(kx, (batch, seq, hidden), dtype=jnp.float32)
    # Module __init__ uses ones; perturb deterministically so the test is
    # non-trivial while keeping the parameter shape (hidden,).
    lambda1 = jnp.ones((hidden,), jnp.float32) + 0.01 * jax.random.normal(
        kl, (hidden,), dtype=jnp.float32)

    out = jax.block_until_ready(dinov2_layer_scale(hidden_state, lambda1))
    ref = hidden_state * lambda1  # broadcast over trailing dim, as in PyTorch
    assert out.shape == hidden_state.shape
    assert jnp.allclose(out, ref, atol=1e-6, rtol=1e-6)

    # Extra coverage: ragged row count (rows % tile != 0) + bf16 activations
    # with an f32 parameter (promoted multiply, result cast to bf16).
    hs2 = jax.random.normal(kx, (2, 7, hidden), dtype=jnp.float32).astype(jnp.bfloat16)
    out2 = jax.block_until_ready(dinov2_layer_scale(hs2, lambda1))
    ref2 = (hs2.astype(jnp.float32) * lambda1).astype(jnp.bfloat16)
    assert out2.shape == hs2.shape
    assert jnp.allclose(out2.astype(jnp.float32), ref2.astype(jnp.float32),
                        atol=1e-2, rtol=1e-2)

    print("KERNEL_OK")
</pallas_src>

<mosaic_0001>
module attributes {stable_mosaic.version = 11 : i64} {
  func.func @_layer_scale_kernel(%arg0: i32, %arg1: i32, %arg2: memref<8x128xf32, #tpu.memory_space<vmem>>, %arg3: memref<1x128xf32, #tpu.memory_space<vmem>>, %arg4: memref<8x128xf32, #tpu.memory_space<vmem>>) attributes {dimension_semantics = [#tpu.dimension_semantics<parallel>, #tpu.dimension_semantics<parallel>], iteration_bounds = array<i64: 1, 1>, scalar_prefetch = 0 : i64, scratch_operands = 0 : i64, tpu.core_type = #tpu.core_type<tc>, window_params = [{transform_indices = @transform_0, window_bounds = array<i64: 8, 128>}, {pipeline_mode = #tpu.pipeline_mode<synchronous>, transform_indices = @transform_1, window_bounds = array<i64: 1, 128>}, {transform_indices = @transform_2, window_bounds = array<i64: 8, 128>}]} {
    %c0 = arith.constant 0 : index
    %c0_0 = arith.constant 0 : index
    %0 = vector.load %arg3[%c0, %c0_0] : memref<1x128xf32, #tpu.memory_space<vmem>>, vector<1x128xf32>
    %c0_1 = arith.constant 0 : index
    %c0_2 = arith.constant 0 : index
    %1 = vector.load %arg2[%c0_1, %c0_2] : memref<8x128xf32, #tpu.memory_space<vmem>>, vector<8x128xf32>
    %2 = vector.broadcast %0 : vector<1x128xf32> to vector<8x128xf32>
    %3 = arith.mulf %1, %2 : vector<8x128xf32>
    %c0_3 = arith.constant 0 : index
    %c0_4 = arith.constant 0 : index
    %4 = vector.load %arg4[%c0_3, %c0_4] : memref<8x128xf32, #tpu.memory_space<vmem>>, vector<8x128xf32>
    tpu.vector_store %arg4[%c0_3, %c0_4], %3 {strides = array<i32>} : memref<8x128xf32, #tpu.memory_space<vmem>>, vector<8x128xf32>,
    return
  }
  func.func @transform_0(%arg0: i32, %arg1: i32) -> (i32, i32) {
    %c0_i32 = arith.constant 0 : i32
    return %arg0, %arg1 : i32, i32
  }
  func.func @transform_1(%arg0: i32, %arg1: i32) -> (i32, i32) {
    %c0_i32 = arith.constant 0 : i32
    %c0_i32_0 = arith.constant 0 : i32
    %c0_i32_1 = arith.constant 0 : i32
    return %c0_i32, %c0_i32_0 : i32, i32
  }
  func.func @transform_2(%arg0: i32, %arg1: i32) -> (i32, i32) {
    %c0_i32 = arith.constant 0 : i32
    return %arg0, %arg1 : i32, i32
  }
}

</mosaic_0001>

<llo_original>
// kernel: tpu_custom_call.1
$region0: #{tpu_custom_call.1}
  #allocation0 [shape = 'u32[]', space=smem, size = 0x4, offset = 0x4, fixed_abs, tag = 'smem constant byte address 0x4 - core index']
  #allocation1 [shape = 'u32[72,128]{1,0:T(1,128)}', space=vmem, size = 0x9000, scoped, tag = 'internal scratch']
  %s0 = inlined_call_operand.hbm [shape: f32[4,128], index: 0, kind: input, shape index: {}, may-alias: {0,2}]
  %s1 = inlined_call_operand.vmem [shape: f32[1,128], index: 1, kind: input, shape index: {}]
  %s2 = inlined_call_operand.hbm [shape: f32[4,128], index: 2, kind: output, shape index: {}, may-alias: {0,2}]
  %s3 = sld [smem:[#allocation0]]
  $region22: #{tpu_custom_call.1} parent=0
    _
  %s5 = ssub.s32 1, %s3
  %s6 = scalar_select 0, %s5, %s3
  $region1: #{tpu_custom_call.1} parent=0
    #allocation2 [shape = 'u8[4096]{0}', space=vmem, size = 0x1000, scoped, tag = 'input window, operand 0, single buffered']
    #allocation3 [shape = 's32[1]{0}', space=sflag, size = 0x4, scoped, tag = 'scoped memory for tpu_custom_call.1']
    #allocation4 [shape = 's32[1]{0}', space=sflag, size = 0x4, scoped, tag = 'scoped memory for tpu_custom_call.1']
    #allocation5 [shape = 'u8[4096]{0}', space=vmem, size = 0x1000, scoped, tag = 'output window, operand 0, single buffered']
    %7 = vsyncpa [#allocation3], 0
    %8 = vsyncpa [#allocation4], 0
    // Predicated region
    $region2: #{tpu_custom_call.1} parent=1 // pred_check
      _
    $region3: #{tpu_custom_call.1} parent=1 // pred_check_branch
      %10 = sbr.rel (0) target = $region5
    $region4: #{tpu_custom_call.1} parent=1 // pred_region
      %12 = vsyncadd [#allocation3], 64
      %s13 = sshll.u32 %s0, 4
      %s14 = int_to_ptr.hbm [resolvable:$true] %s13
      %s15 = sshll.u32 [#allocation2], 4
      %s16 = int_to_ptr.vmem [resolvable:$true] %s15
      %21 = dma.hbm_to_vmem [thread:$0]  %s14, 64, %s16, [#allocation3], 64, 64, 4
    $region5: #{tpu_custom_call.1} parent=1 // pred_fallthru
      _
    // Predicated region
    $region6: #{tpu_custom_call.1} parent=1 // pred_check
      _
    $region7: #{tpu_custom_call.1} parent=1 // pred_check_branch
      %23 = sbr.rel (0) target = $region9
    $region8: #{tpu_custom_call.1} parent=1 // pred_region
      _
    $region9: #{tpu_custom_call.1} parent=1 // pred_fallthru
      _
    // Predicated region
    $region10: #{tpu_custom_call.1} parent=1 // pred_check
      _
    $region11: #{tpu_custom_call.1} parent=1 // pred_check_branch
      %25 = sbr.rel (0) target = $region13
    $region12: #{tpu_custom_call.1} parent=1 // pred_region
      %27 = dma.done [#allocation3], 128
    $region13: #{tpu_custom_call.1} parent=1 // pred_fallthru
      _
    %v28 = vld [vmem:[%s1] sm:$0x1]
    %v29 = vld [vmem:[#allocation2] sm:$0xff]
    %v31 = vperm.slane %v28, 0
    %v33 = vmul.f32 %v29, %v31
    %34 = vst [vmem:[#allocation5] sm:$0xff] %v33
    // Predicated region
    $region14: #{tpu_custom_call.1} parent=1 // pred_check
      _
    $region15: #{tpu_custom_call.1} parent=1 // pred_check_branch
      %36 = sbr.rel (0) target = $region17
    $region16: #{tpu_custom_call.1} parent=1 // pred_region
      %38 = vsyncadd [#allocation4], 64
      %s39 = sshll.u32 [#allocation5], 4
      %s40 = int_to_ptr.vmem [resolvable:$true] %s39
      %s41 = sshll.u32 %s2, 4
      %s42 = int_to_ptr.hbm [resolvable:$true] %s41
      %47 = dma.vmem_to_hbm [thread:$0]  %s40, 64, %s42, [#allocation4], 64, 64, 4
    $region17: #{tpu_custom_call.1} parent=1 // pred_fallthru
      _
    // Predicated region
    $region18: #{tpu_custom_call.1} parent=1 // pred_check
      _
    $region19: #{tpu_custom_call.1} parent=1 // pred_check_branch
      %49 = sbr.rel (0) target = $region21
    $region20: #{tpu_custom_call.1} parent=1 // pred_region
      %51 = dma.done [#allocation4], 128
    $region21: #{tpu_custom_call.1} parent=1 // pred_fallthru
      _
    %52 = vsyncpa [#allocation3], 1
    %53 = vsyncpa [#allocation4], 1

</llo_original>
